<compile_context>
chip_gen: v6e
topology: v6e:2x2x1
jax: 0.10.0
libtpu: 0.0.40
codegen_flags: <defaults>
</compile_context>

<pallas_src>
import jax
import jax.numpy as jnp
from jax.experimental import pallas as pl
from jax.experimental.pallas import tpu as pltpu


def _round_up(x: int, m: int) -> int:
    return ((x + m - 1) // m) * m


def policy_kernel(state_ref, w1_ref, b1_ref, w2_ref, b2_ref, out_ref):
    # fc1 + relu (accumulate in f32 regardless of input dtype)
    x = state_ref[...]                                        # (TB, S)
    h = jnp.dot(x, w1_ref[...], preferred_element_type=jnp.float32)
    h = jnp.maximum(h + b1_ref[...], 0.0)                     # (TB, H_pad) f32

    # fc2 (cast hidden back to the matmul dtype so the MXU runs bf16 when asked)
    logits = jnp.dot(h.astype(w2_ref.dtype), w2_ref[...],
                     preferred_element_type=jnp.float32)
    logits = logits + b2_ref[...]                             # padded cols -> -1e30

    # softmax along the action axis, numerically stable, always in f32.
    m = jnp.max(logits, axis=-1, keepdims=True)
    e = jnp.exp(logits - m)                                   # padded cols -> 0
    denom = jnp.sum(e, axis=-1, keepdims=True)
    out_ref[...] = (e * pl.reciprocal(denom, approx=False)).astype(out_ref.dtype)


def policy_network_forward(state, w1, b1, w2, b2, *,
                           compute_dtype=jnp.float32, block_b=1024):
    """state: (B, S); w1: (S, H); b1: (H,); w2: (H, A); b2: (A,). Returns (B, A) f32.

    compute_dtype: jnp.float32 (default) or jnp.bfloat16 (recommended on v6e/v7x
    at large B — halves HBM traffic for the dominant `state` stream).
    """
    B, S = state.shape
    H = w1.shape[1]
    A = w2.shape[1]

    H_pad = max(_round_up(H, 128), 128)     # lane-dense hidden
    A_pad = max(_round_up(A, 128), 128)     # lane-dense output
    TB = min(block_b, _round_up(B, 8))      # batch tile (multiple of 8 sublanes)
    B_pad = _round_up(B, TB)

    # Zero-pad hidden dim: zero w1 columns / b1 entries relu to 0 and the matching
    # zero w2 rows contribute 0 to fc2 -> bit-identical results.
    w1p = jnp.zeros((S, H_pad), compute_dtype).at[:, :H].set(w1.astype(compute_dtype))
    b1p = jnp.zeros((1, H_pad), jnp.float32).at[:, :H].set(b1.astype(jnp.float32))
    w2p = jnp.zeros((H_pad, A_pad), compute_dtype).at[:H, :A].set(w2.astype(compute_dtype))
    # Pad action dim via the bias: padded logits become ~-1e30, exp() underflows
    # to exactly 0, so the padded columns never perturb the real distribution.
    b2p = jnp.full((1, A_pad), -1e30, jnp.float32).at[:, :A].set(b2.astype(jnp.float32))

    state_p = state
    if B_pad != B:
        state_p = jnp.zeros((B_pad, S), state.dtype).at[:B].set(state)
    state_p = state_p.astype(compute_dtype)

    grid = (B_pad // TB,)
    # VMEM footprint per step (TB=1024): state 1024*S*4B + out 1024*128*4B plus
    # resident weights — well under the 32 MiB scoped default even on v7x
    # (64 MiB physical), so no vmem_limit_bytes override is needed.
    out = pl.pallas_call(
        policy_kernel,
        out_shape=jax.ShapeDtypeStruct((B_pad, A_pad), jnp.float32),
        grid=grid,
        in_specs=[
            pl.BlockSpec((TB, S), lambda i: (i, 0)),          # streamed per tile
            pl.BlockSpec((S, H_pad), lambda i: (0, 0)),       # resident weights
            pl.BlockSpec((1, H_pad), lambda i: (0, 0)),
            pl.BlockSpec((H_pad, A_pad), lambda i: (0, 0)),
            pl.BlockSpec((1, A_pad), lambda i: (0, 0)),
        ],
        out_specs=pl.BlockSpec((TB, A_pad), lambda i: (i, 0)),
        compiler_params=pltpu.CompilerParams(
            # Batch rows are independent -> shard grid across TensorCores (v7x).
            dimension_semantics=("parallel",),
        ),
    )(state_p, w1p, b1p, w2p, b2p)
    return out[:B, :A]


def reference_forward(state, w1, b1, w2, b2):
    h = jnp.maximum(state @ w1 + b1, 0.0)
    logits = h @ w2 + b2
    return jax.nn.softmax(logits, axis=1)


if __name__ == "__main__":
    # Small shapes consistent with a PPO policy head.
    state_size = 16
    hidden_size = 64
    action_size = 8

    key = jax.random.PRNGKey(0)
    k_state, k_w1, k_b1, k_w2, k_b2, k_state2 = jax.random.split(key, 6)

    # Deterministic synthetic parameters (PyTorch Linear uses (out, in);
    # we store the transpose (in, out) for row-major matmul in the kernel).
    bound1 = 1.0 / jnp.sqrt(state_size)
    bound2 = 1.0 / jnp.sqrt(hidden_size)
    w1 = jax.random.uniform(k_w1, (state_size, hidden_size), jnp.float32,
                            -bound1, bound1)
    b1 = jax.random.uniform(k_b1, (hidden_size,), jnp.float32, -bound1, bound1)
    w2 = jax.random.uniform(k_w2, (hidden_size, action_size), jnp.float32,
                            -bound2, bound2)
    b2 = jax.random.uniform(k_b2, (action_size,), jnp.float32, -bound2, bound2)

    # --- run 1: f32, batch multiple of 8 ---
    batch = 8
    state = jax.random.normal(k_state, (batch, state_size), jnp.float32)
    probs = jax.block_until_ready(policy_network_forward(state, w1, b1, w2, b2))
    ref = reference_forward(state, w1, b1, w2, b2)
    assert probs.shape == (batch, action_size)
    assert jnp.allclose(probs, ref, atol=1e-5, rtol=1e-5), "f32 mismatch vs reference"
    assert jnp.allclose(jnp.sum(probs, axis=1), 1.0, atol=1e-5), "rows must sum to 1"

    # --- run 2: f32, ragged batch (exercises batch padding / slicing) ---
    batch2 = 50
    state2 = jax.random.normal(k_state2, (batch2, state_size), jnp.float32)
    probs2 = jax.block_until_ready(policy_network_forward(state2, w1, b1, w2, b2))
    ref2 = reference_forward(state2, w1, b1, w2, b2)
    assert probs2.shape == (batch2, action_size)
    assert jnp.allclose(probs2, ref2, atol=1e-5, rtol=1e-5), "ragged-batch mismatch"

    # --- run 3: bf16 compute path (v6e/v7x option); softmax still f32 ---
    probs_bf16 = jax.block_until_ready(
        policy_network_forward(state, w1, b1, w2, b2, compute_dtype=jnp.bfloat16))
    assert probs_bf16.shape == (batch, action_size)
    assert jnp.allclose(probs_bf16, ref, atol=5e-2, rtol=5e-2), "bf16 path mismatch"
    assert jnp.allclose(jnp.sum(probs_bf16, axis=1), 1.0, atol=1e-4)

    print("KERNEL_OK")
</pallas_src>

<mosaic_0001>
module attributes {stable_mosaic.version = 11 : i64} {
  func.func @policy_kernel(%arg0: i32, %arg1: memref<8x16xf32, #tpu.memory_space<vmem>>, %arg2: memref<16x128xf32, #tpu.memory_space<vmem>>, %arg3: memref<1x128xf32, #tpu.memory_space<vmem>>, %arg4: memref<128x128xf32, #tpu.memory_space<vmem>>, %arg5: memref<1x128xf32, #tpu.memory_space<vmem>>, %arg6: memref<8x128xf32, #tpu.memory_space<vmem>>) attributes {dimension_semantics = [#tpu.dimension_semantics<parallel>], iteration_bounds = array<i64: 1>, scalar_prefetch = 0 : i64, scratch_operands = 0 : i64, tpu.core_type = #tpu.core_type<tc>, window_params = [{transform_indices = @transform_0, window_bounds = array<i64: 8, 16>}, {pipeline_mode = #tpu.pipeline_mode<synchronous>, transform_indices = @transform_1, window_bounds = array<i64: 16, 128>}, {pipeline_mode = #tpu.pipeline_mode<synchronous>, transform_indices = @transform_2, window_bounds = array<i64: 1, 128>}, {pipeline_mode = #tpu.pipeline_mode<synchronous>, transform_indices = @transform_3, window_bounds = array<i64: 128, 128>}, {pipeline_mode = #tpu.pipeline_mode<synchronous>, transform_indices = @transform_4, window_bounds = array<i64: 1, 128>}, {transform_indices = @transform_5, window_bounds = array<i64: 8, 128>}]} {
    %c0 = arith.constant 0 : index
    %c0_0 = arith.constant 0 : index
    %0 = vector.load %arg1[%c0, %c0_0] : memref<8x16xf32, #tpu.memory_space<vmem>>, vector<8x16xf32>
    %c0_1 = arith.constant 0 : index
    %c0_2 = arith.constant 0 : index
    %1 = vector.load %arg2[%c0_1, %c0_2] : memref<16x128xf32, #tpu.memory_space<vmem>>, vector<16x128xf32>
    %cst = arith.constant dense<0.000000e+00> : vector<8x128xf32>
    %2 = tpu.matmul %0, %1, %cst {dimension_numbers = #tpu.dot_dimension_numbers<[1], [0], [0], [1], [0, 0, 1, 1], [], []>} : vector<8x16xf32>, vector<16x128xf32>, vector<8x128xf32> -> vector<8x128xf32>
    %c0_3 = arith.constant 0 : index
    %c0_4 = arith.constant 0 : index
    %3 = vector.load %arg3[%c0_3, %c0_4] : memref<1x128xf32, #tpu.memory_space<vmem>>, vector<1x128xf32>
    %4 = vector.broadcast %3 : vector<1x128xf32> to vector<8x128xf32>
    %5 = arith.addf %2, %4 : vector<8x128xf32>
    %cst_5 = arith.constant 0.000000e+00 : f32
    %6 = vector.broadcast %cst_5 : f32 to vector<8x128xf32>
    %7 = arith.maximumf %5, %6 : vector<8x128xf32>
    %c0_6 = arith.constant 0 : index
    %c0_7 = arith.constant 0 : index
    %8 = vector.load %arg4[%c0_6, %c0_7] : memref<128x128xf32, #tpu.memory_space<vmem>>, vector<128x128xf32>
    %cst_8 = arith.constant dense<0.000000e+00> : vector<8x128xf32>
    %9 = tpu.matmul %7, %8, %cst_8 {dimension_numbers = #tpu.dot_dimension_numbers<[1], [0], [0], [1], [0, 0, 1, 1], [], []>} : vector<8x128xf32>, vector<128x128xf32>, vector<8x128xf32> -> vector<8x128xf32>
    %c0_9 = arith.constant 0 : index
    %c0_10 = arith.constant 0 : index
    %10 = vector.load %arg5[%c0_9, %c0_10] : memref<1x128xf32, #tpu.memory_space<vmem>>, vector<1x128xf32>
    %11 = vector.broadcast %10 : vector<1x128xf32> to vector<8x128xf32>
    %12 = arith.addf %9, %11 : vector<8x128xf32>
    %cst_11 = arith.constant dense<0xFF800000> : vector<8xf32>
    %13 = vector.multi_reduction <maximumf>, %12, %cst_11 [1] : vector<8x128xf32> to vector<8xf32>
    %14 = vector.shape_cast %13 : vector<8xf32> to vector<8x1xf32>
    %15 = vector.broadcast %14 : vector<8x1xf32> to vector<8x128xf32>
    %16 = arith.subf %12, %15 : vector<8x128xf32>
    %17 = math.exp %16 : vector<8x128xf32>
    %cst_12 = arith.constant dense<0.000000e+00> : vector<8xf32>
    %18 = vector.multi_reduction <add>, %17, %cst_12 [1] : vector<8x128xf32> to vector<8xf32>
    %19 = vector.shape_cast %18 : vector<8xf32> to vector<8x1xf32>
    %20 = tpu.reciprocal %19 : vector<8x1xf32> -> vector<8x1xf32>
    %21 = vector.broadcast %20 : vector<8x1xf32> to vector<8x128xf32>
    %22 = arith.mulf %17, %21 : vector<8x128xf32>
    %c0_13 = arith.constant 0 : index
    %c0_14 = arith.constant 0 : index
    %23 = vector.load %arg6[%c0_13, %c0_14] : memref<8x128xf32, #tpu.memory_space<vmem>>, vector<8x128xf32>
    tpu.vector_store %arg6[%c0_13, %c0_14], %22 {strides = array<i32>} : memref<8x128xf32, #tpu.memory_space<vmem>>, vector<8x128xf32>,
    return
  }
  func.func @transform_0(%arg0: i32) -> (i32, i32) {
    %c0_i32 = arith.constant 0 : i32
    %c0_i32_0 = arith.constant 0 : i32
    return %arg0, %c0_i32 : i32, i32
  }
  func.func @transform_1(%arg0: i32) -> (i32, i32) {
    %c0_i32 = arith.constant 0 : i32
    %c0_i32_0 = arith.constant 0 : i32
    %c0_i32_1 = arith.constant 0 : i32
    return %c0_i32, %c0_i32_0 : i32, i32
  }
  func.func @transform_2(%arg0: i32) -> (i32, i32) {
    %c0_i32 = arith.constant 0 : i32
    %c0_i32_0 = arith.constant 0 : i32
    %c0_i32_1 = arith.constant 0 : i32
    return %c0_i32, %c0_i32_0 : i32, i32
  }
  func.func @transform_3(%arg0: i32) -> (i32, i32) {
    %c0_i32 = arith.constant 0 : i32
    %c0_i32_0 = arith.constant 0 : i32
    %c0_i32_1 = arith.constant 0 : i32
    return %c0_i32, %c0_i32_0 : i32, i32
  }
  func.func @transform_4(%arg0: i32) -> (i32, i32) {
    %c0_i32 = arith.constant 0 : i32
    %c0_i32_0 = arith.constant 0 : i32
    %c0_i32_1 = arith.constant 0 : i32
    return %c0_i32, %c0_i32_0 : i32, i32
  }
  func.func @transform_5(%arg0: i32) -> (i32, i32) {
    %c0_i32 = arith.constant 0 : i32
    %c0_i32_0 = arith.constant 0 : i32
    return %arg0, %c0_i32 : i32, i32
  }
}

</mosaic_0001>

<llo_original>
// kernel: tpu_custom_call.1
$region0: #{tpu_custom_call.1}
  #allocation0 [shape = 'u32[]', space=smem, size = 0x4, offset = 0x4, fixed_abs, tag = 'smem constant byte address 0x4 - core index']
  #allocation1 [shape = 'u32[144,128]{1,0:T(1,128)}', space=vmem, size = 0x12000, scoped, tag = 'internal scratch']
  %s0 = inlined_call_operand.hbm [shape: f32[8,16], index: 0, kind: input, shape index: {}]
  %s1 = inlined_call_operand.hbm [shape: f32[16,128], index: 1, kind: input, shape index: {}]
  %s2 = inlined_call_operand.vmem [shape: f32[1,128], index: 2, kind: input, shape index: {}]
  %s3 = inlined_call_operand.hbm [shape: f32[128,128], index: 3, kind: input, shape index: {}]
  %s4 = inlined_call_operand.vmem [shape: f32[1,128], index: 4, kind: input, shape index: {}]
  %s5 = inlined_call_operand.hbm [shape: f32[8,128], index: 5, kind: output, shape index: {}]
  %s6 = sld [smem:[#allocation0]]
  $region42: #{tpu_custom_call.1} parent=0
    _
  %s8 = ssub.s32 1, %s6
  %s9 = scalar_select 0, %s8, %s6
  $region1: #{tpu_custom_call.1} parent=0
    #allocation2 [shape = 'u8[4096]{0}', space=vmem, size = 0x1000, scoped, tag = 'input window, operand 0, single buffered']
    #allocation3 [shape = 's32[1]{0}', space=sflag, size = 0x4, scoped, tag = 'scoped memory for tpu_custom_call.1']
    #allocation4 [shape = 's32[1]{0}', space=sflag, size = 0x4, scoped, tag = 'scoped memory for tpu_custom_call.1']
    #allocation5 [shape = 'u8[8192]{0}', space=vmem, size = 0x2000, scoped, tag = 'input window, operand 1, single buffered']
    #allocation6 [shape = 's32[1]{0}', space=sflag, size = 0x4, scoped, tag = 'scoped memory for tpu_custom_call.1']
    #allocation7 [shape = 'u8[65536]{0}', space=vmem, size = 0x10000, scoped, tag = 'input window, operand 3, single buffered']
    #allocation8 [shape = 'u8[4096]{0}', space=vmem, size = 0x1000, scoped, tag = 'output window, operand 0, single buffered']
    %10 = vsyncpa [#allocation3], 0
    %11 = vsyncpa [#allocation6], 0
    %12 = vsyncpa [#allocation4], 0
    // Predicated region
    $region2: #{tpu_custom_call.1} parent=1 // pred_check
      _
    $region3: #{tpu_custom_call.1} parent=1 // pred_check_branch
      %14 = sbr.rel (0) target = $region5
    $region4: #{tpu_custom_call.1} parent=1 // pred_region
      %s16 = ssub.s32 128, 128
      %17 = vsyncadd [#allocation3], %s16
      %s19 = sshll.u32 [#allocation2], 4
      %s20 = int_to_ptr.vmem [resolvable:$true] %s19
      %22 = dma.hbm_to_vmem [thread:$0]  %s0, 128, %s20, [#allocation3]
    $region5: #{tpu_custom_call.1} parent=1 // pred_fallthru
      _
    // Predicated region
    $region6: #{tpu_custom_call.1} parent=1 // pred_check
      _
    $region7: #{tpu_custom_call.1} parent=1 // pred_check_branch
      %24 = sbr.rel (0) target = $region9
    $region8: #{tpu_custom_call.1} parent=1 // pred_region
      %s26 = ssub.s32 256, 256
      %27 = vsyncadd [#allocation6], %s26
      %s28 = sshll.u32 [#allocation5], 4
      %s29 = int_to_ptr.vmem [resolvable:$true] %s28
      %34 = dma.hbm_to_vmem [thread:$0]  %s1, 256, %s29, [#allocation6], 128, 128, 8
    $region9: #{tpu_custom_call.1} parent=1 // pred_fallthru
      _
    // Predicated region
    $region10: #{tpu_custom_call.1} parent=1 // pred_check
      _
    $region11: #{tpu_custom_call.1} parent=1 // pred_check_branch
      %36 = sbr.rel (0) target = $region13
    $region12: #{tpu_custom_call.1} parent=1 // pred_region
      _
    $region13: #{tpu_custom_call.1} parent=1 // pred_fallthru
      _
    // Predicated region
    $region14: #{tpu_custom_call.1} parent=1 // pred_check
      _
    $region15: #{tpu_custom_call.1} parent=1 // pred_check_branch
      %38 = sbr.rel (0) target = $region17
    $region16: #{tpu_custom_call.1} parent=1 // pred_region
      %s40 = ssub.s32 2048, 2048
      %41 = vsyncadd [#allocation6], %s40
      %s42 = sshll.u32 [#allocation7], 4
      %s43 = int_to_ptr.vmem [resolvable:$true] %s42
      %48 = dma.hbm_to_vmem [thread:$0]  %s3, 2048, %s43, [#allocation6], 128, 128, 8
    $region17: #{tpu_custom_call.1} parent=1 // pred_fallthru
      _
    // Predicated region
    $region18: #{tpu_custom_call.1} parent=1 // pred_check
      _
    $region19: #{tpu_custom_call.1} parent=1 // pred_check_branch
      %50 = sbr.rel (0) target = $region21
    $region20: #{tpu_custom_call.1} parent=1 // pred_region
      _
    $region21: #{tpu_custom_call.1} parent=1 // pred_fallthru
      _
    // Predicated region
    $region22: #{tpu_custom_call.1} parent=1 // pred_check
      _
    $region23: #{tpu_custom_call.1} parent=1 // pred_check_branch
      %52 = sbr.rel (0) target = $region25
    $region24: #{tpu_custom_call.1} parent=1 // pred_region
      %53 = dma.done [#allocation3], 128
    $region25: #{tpu_custom_call.1} parent=1 // pred_fallthru
      _
    // Predicated region
    $region26: #{tpu_custom_call.1} parent=1 // pred_check
      _
    $region27: #{tpu_custom_call.1} parent=1 // pred_check_branch
      %55 = sbr.rel (0) target = $region29
    $region28: #{tpu_custom_call.1} parent=1 // pred_region
      %56 = dma.done [#allocation6], 256
    $region29: #{tpu_custom_call.1} parent=1 // pred_fallthru
      _
    // Predicated region
    $region30: #{tpu_custom_call.1} parent=1 // pred_check
      _
    $region31: #{tpu_custom_call.1} parent=1 // pred_check_branch
      %58 = sbr.rel (0) target = $region33
    $region32: #{tpu_custom_call.1} parent=1 // pred_region
      %59 = dma.done [#allocation6], 2048
    $region33: #{tpu_custom_call.1} parent=1 // pred_fallthru
      _
    %v60 = vld [vmem:[#allocation2] sm:$0xff]
    %v61 = vld [vmem:[#allocation5] sm:$0xff]
    %v62 = vld [vmem:[#allocation5 + $0x8] sm:$0xff]
    %v63 = vld [vmem:[%s2] sm:$0x1]
    %v65 = vlaneseq
    %v66 = vshrl.u32 %v65, 7
    %v67 = vsub.s32 0, %v66
    %v68 = vrot.slane %v63, %v67
    %vm70 = vcmask 130048
    %v72 = vsel %vm70, %v60, 0
    %74 = vmatprep.subr.mxu0 0.0
    %75 = vmatpush1.msra.mxu0 0.0
    %76 = vmatprep.subr.mxu0 0.0
    %77 = vmatpush1.msra.mxu0 0.0
    %78 = vmatprep.subr.mxu0 0.0
    %79 = vmatpush1.msra.mxu0 0.0
    %80 = vmatprep.subr.mxu0 0.0
    %81 = vmatpush1.msra.mxu0 0.0
    %82 = vmatprep.subr.mxu0 0.0
    %83 = vmatpush1.msra.mxu0 0.0
    %84 = vmatprep.subr.mxu0 0.0
    %85 = vmatpush1.msra.mxu0 0.0
    %86 = vmatprep.subr.mxu0 0.0
    %87 = vmatpush1.msra.mxu0 0.0
    %88 = vmatprep.subr.mxu0 0.0
    %89 = vmatpush1.msra.mxu0 0.0
    %90 = vmatprep.subr.mxu0 0.0
    %91 = vmatpush1.msra.mxu0 0.0
    %92 = vmatprep.subr.mxu0 0.0
    %93 = vmatpush1.msra.mxu0 0.0
    %94 = vmatprep.subr.mxu0 0.0
    %95 = vmatpush1.msra.mxu0 0.0
    %96 = vmatprep.subr.mxu0 0.0
    %97 = vmatpush1.msra.mxu0 0.0
    %98 = vmatprep.subr.mxu0 0.0
    %99 = vmatpush1.msra.mxu0 0.0
    %100 = vmatprep.subr.mxu0 0.0
    %101 = vmatpush1.msra.mxu0 0.0
    %102 = vmatprep.subr.mxu0 0.0
    %103 = vmatpush1.msra.mxu0 %v62
    %104 = vmatprep.subr.mxu0 0.0
    %105 = vmatpush1.msra.mxu0 %v61
    %106 = vmatprep.subr.mxu0 0.0
    %107 = vmatpush2.msra.mxu0 0.0
    %108 = vmatprep.subr.mxu0 0.0
    %109 = vmatpush2.msra.mxu0 0.0
    %110 = vmatprep.subr.mxu0 0.0
    %111 = vmatpush2.msra.mxu0 0.0
    %112 = vmatprep.subr.mxu0 0.0
    %113 = vmatpush2.msra.mxu0 0.0
    %114 = vmatprep.subr.mxu0 0.0
    %115 = vmatpush2.msra.mxu0 0.0
    %116 = vmatprep.subr.mxu0 0.0
    %117 = vmatpush2.msra.mxu0 0.0
    %118 = vmatprep.subr.mxu0 0.0
    %119 = vmatpush2.msra.mxu0 0.0
    %120 = vmatprep.subr.mxu0 0.0
    %121 = vmatpush2.msra.mxu0 0.0
    %122 = vmatprep.subr.mxu0 0.0
    %123 = vmatpush2.msra.mxu0 0.0
    %124 = vmatprep.subr.mxu0 0.0
    %125 = vmatpush2.msra.mxu0 0.0
    %126 = vmatprep.subr.mxu0 0.0
    %127 = vmatpush2.msra.mxu0 0.0
    %128 = vmatprep.subr.mxu0 0.0
    %129 = vmatpush2.msra.mxu0 0.0
    %130 = vmatprep.subr.mxu0 0.0
    %131 = vmatpush2.msra.mxu0 0.0
    %132 = vmatprep.subr.mxu0 0.0
    %133 = vmatpush2.msra.mxu0 0.0
    %134 = vmatprep.subr.mxu0 0.0
    %135 = vmatpush2.msra.mxu0 0.0
    %136 = vmatprep.subr.mxu0 0.0
    %137 = vmatpush2.msra.mxu0 0.0
    %138 = vmatprep.mubr.f32.mxu0 0.0
    %139 = vmatmul.mubr.f32.gmra.mxu0 %v72
    %v140 = vpop.f32.mrf.mxu0
    %v141 = vadd.f32 %v68, %v140
    %v142 = vpop.f32.mrf.mxu0
    %143 = vdwg.mxu0
    %v144 = vmax.f32 %v141, 0.0
    %v145 = vld [vmem:[#allocation7] sm:$0xff]
    %v146 = vld [vmem:[#allocation7 + $0x8] sm:$0xff]
    %v147 = vld [vmem:[#allocation7 + $0x10] sm:$0xff]
    %v148 = vld [vmem:[#allocation7 + $0x18] sm:$0xff]
    %v149 = vld [vmem:[#allocation7 + $0x20] sm:$0xff]
    %v150 = vld [vmem:[#allocation7 + $0x28] sm:$0xff]
    %v151 = vld [vmem:[#allocation7 + $0x30] sm:$0xff]
    %v152 = vld [vmem:[#allocation7 + $0x38] sm:$0xff]
    %v153 = vld [vmem:[#allocation7 + $0x40] sm:$0xff]
    %v154 = vld [vmem:[#allocation7 + $0x48] sm:$0xff]
    %v155 = vld [vmem:[#allocation7 + $0x50] sm:$0xff]
    %v156 = vld [vmem:[#allocation7 + $0x58] sm:$0xff]
    %v157 = vld [vmem:[#allocation7 + $0x60] sm:$0xff]
    %v158 = vld [vmem:[#allocation7 + $0x68] sm:$0xff]
    %v159 = vld [vmem:[#allocation7 + $0x70] sm:$0xff]
    %v160 = vld [vmem:[#allocation7 + $0x78] sm:$0xff]
    %v161 = vld [vmem:[%s4] sm:$0x1]
    %v163 = vlaneseq
    %v164 = vshrl.u32 %v163, 7
    %v165 = vsub.s32 0, %v164
    %v166 = vrot.slane %v161, %v165
    %168 = vmatprep.subr.mxu0 0.0
    %169 = vmatpush1.msra.mxu0 %v160
    %170 = vmatprep.subr.mxu0 0.0
    %171 = vmatpush1.msra.mxu0 %v159
    %172 = vmatprep.subr.mxu0 0.0
    %173 = vmatpush1.msra.mxu0 %v158
    %174 = vmatprep.subr.mxu0 0.0
    %175 = vmatpush1.msra.mxu0 %v157
    %176 = vmatprep.subr.mxu0 0.0
    %177 = vmatpush1.msra.mxu0 %v156
    %178 = vmatprep.subr.mxu0 0.0
    %179 = vmatpush1.msra.mxu0 %v155
    %180 = vmatprep.subr.mxu0 0.0
    %181 = vmatpush1.msra.mxu0 %v154
    %182 = vmatprep.subr.mxu0 0.0
    %183 = vmatpush1.msra.mxu0 %v153
    %184 = vmatprep.subr.mxu0 0.0
    %185 = vmatpush1.msra.mxu0 %v152
    %186 = vmatprep.subr.mxu0 0.0
    %187 = vmatpush1.msra.mxu0 %v151
    %188 = vmatprep.subr.mxu0 0.0
    %189 = vmatpush1.msra.mxu0 %v150
    %190 = vmatprep.subr.mxu0 0.0
    %191 = vmatpush1.msra.mxu0 %v149
    %192 = vmatprep.subr.mxu0 0.0
    %193 = vmatpush1.msra.mxu0 %v148
    %194 = vmatprep.subr.mxu0 0.0
    %195 = vmatpush1.msra.mxu0 %v147
    %196 = vmatprep.subr.mxu0 0.0
    %197 = vmatpush1.msra.mxu0 %v146
    %198 = vmatprep.subr.mxu0 0.0
    %199 = vmatpush1.msra.mxu0 %v145
    %200 = vmatprep.subr.mxu0 0.0
    %201 = vmatpush2.msra.mxu0 0.0
    %202 = vmatprep.subr.mxu0 0.0
    %203 = vmatpush2.msra.mxu0 0.0
    %204 = vmatprep.subr.mxu0 0.0
    %205 = vmatpush2.msra.mxu0 0.0
    %206 = vmatprep.subr.mxu0 0.0
    %207 = vmatpush2.msra.mxu0 0.0
    %208 = vmatprep.subr.mxu0 0.0
    %209 = vmatpush2.msra.mxu0 0.0
    %210 = vmatprep.subr.mxu0 0.0
    %211 = vmatpush2.msra.mxu0 0.0
    %212 = vmatprep.subr.mxu0 0.0
    %213 = vmatpush2.msra.mxu0 0.0
    %214 = vmatprep.subr.mxu0 0.0
    %215 = vmatpush2.msra.mxu0 0.0
    %216 = vmatprep.subr.mxu0 0.0
    %217 = vmatpush2.msra.mxu0 0.0
    %218 = vmatprep.subr.mxu0 0.0
    %219 = vmatpush2.msra.mxu0 0.0
    %220 = vmatprep.subr.mxu0 0.0
    %221 = vmatpush2.msra.mxu0 0.0
    %222 = vmatprep.subr.mxu0 0.0
    %223 = vmatpush2.msra.mxu0 0.0
    %224 = vmatprep.subr.mxu0 0.0
    %225 = vmatpush2.msra.mxu0 0.0
    %226 = vmatprep.subr.mxu0 0.0
    %227 = vmatpush2.msra.mxu0 0.0
    %228 = vmatprep.subr.mxu0 0.0
    %229 = vmatpush2.msra.mxu0 0.0
    %230 = vmatprep.subr.mxu0 0.0
    %231 = vmatpush2.msra.mxu0 0.0
    %232 = vmatprep.mubr.f32.mxu0 0.0
    %233 = vmatmul.mubr.f32.gmra.mxu0 %v144
    %v234 = vpop.f32.mrf.mxu0
    %v235 = vadd.f32 %v166, %v234
    %v236 = vpop.f32.mrf.mxu0
    %237 = vdwg.mxu0
    %238 = vmax.xlane.f32.xlu0 %v235
    %v239 = vpop.xlane.xlu0 %238
    %v240 = vsub.f32 %v235, %v239
    %v241 = vmul.f32 %v240, 1.442695
    %v242 = vpow.pop %v241
    %243 = vadd.xlane.f32.xlu0 %v242
    %v244 = vpop.xlane.xlu0 %243
    %v245 = vrcp.pop %v244
    %v246 = vmul.f32 %v242, %v245
    %247 = vst [vmem:[#allocation8] sm:$0xff] %v246
    // Predicated region
    $region34: #{tpu_custom_call.1} parent=1 // pred_check
      _
    $region35: #{tpu_custom_call.1} parent=1 // pred_check_branch
      %249 = sbr.rel (0) target = $region37
    $region36: #{tpu_custom_call.1} parent=1 // pred_region
      %s251 = ssub.s32 128, 128
      %252 = vsyncadd [#allocation4], %s251
      %s254 = sshll.u32 [#allocation8], 4
      %s255 = int_to_ptr.vmem [resolvable:$true] %s254
      %257 = dma.vmem_to_hbm [thread:$0]  %s255, 128, %s5, [#allocation4]
    $region37: #{tpu_custom_call.1} parent=1 // pred_fallthru
      _
    // Predicated region
    $region38: #{tpu_custom_call.1} parent=1 // pred_check
      _
    $region39: #{tpu_custom_call.1} parent=1 // pred_check_branch
      %259 = sbr.rel (0) target = $region41
    $region40: #{tpu_custom_call.1} parent=1 // pred_region
      %260 = dma.done [#allocation4], 128
    $region41: #{tpu_custom_call.1} parent=1 // pred_fallthru
      _
    %261 = vsyncpa [#allocation3], 1
    %262 = vsyncpa [#allocation6], 1
    %263 = vsyncpa [#allocation4], 1

</llo_original>
